<compile_context>
chip_gen: v7x
topology: tpu7x:2x2x1
jax: 0.10.0
libtpu: 0.0.40
codegen_flags: <defaults>
</compile_context>

<pallas_src>
import math
import numpy as np
import jax
import jax.numpy as jnp
from jax import lax
from jax.experimental import pallas as pl
from jax.experimental.pallas import tpu as pltpu


def tr_conv_kernel(p_ref, x_ref, o_ref):
    """p_ref: (O, 3*C+1) packed params; column k*C+c holds W[:, c, k], last column is bias.
    x_ref: (1, C, T) input block for the current batch element, o_ref: (1, O, T) output.
    Time stays on the lane axis throughout."""
    x = x_ref[0]                              # (C, T) f32
    p = p_ref[...]                            # (O, 3C+1) f32
    C, T = x.shape
    O = p.shape[0]

    def w(k, c):                              # (O, 1): W[:, c, k] — static lane slice
        i = k * C + c
        return p[:, i:i + 1]

    bias = p[:, 3 * C:3 * C + 1]              # (O, 1)

    # One shifted view of x: xs[:, t] = x[:, t+1] for t < T-1; last column reflect-style
    # (= x[:, T-2]) so that the R reflect tail needs no separate fixup below.
    xs = jnp.concatenate([x[:, 1:], x[:, T - 2:T - 1]], axis=1)       # (C, T)

    def tap(k, xin):                          # sum_c W[o, c, k] * xin[c, t]  -> (O, T)
        acc = w(k, 0) * xin[0:1, :]
        for c in range(1, C):
            acc = acc + w(k, c) * xin[c:c + 1, :]
        return acc                            # pure fp32 VPU broadcast-FMAs (no MXU)

    y0 = tap(0, x)                            # W0 . x[t]
    y1 = tap(1, x)                            # W1 . x[t]
    y1s = tap(1, xs)                          # W1 . x[t+1]   (lane T-1 holds W1 . x[T-2])
    y2s = tap(2, xs)                          # W2 . x[t+1]   (lane T-1 holds W2 . x[T-2])

    l_full = bias + y1                        # L[t] = b + W1.x[t]
    # R_pad[t] = b + W1.x[t+1] for t<T-1; lane T-1 already equals b + W1.x[T-2] = R[T-3]
    r_pad = bias + y1s
    # A core: b + W0.x[t] + W2.x[t+1], valid for t <= T-2
    a_core = bias + y0 + y2s

    lane = lax.broadcasted_iota(jnp.int32, (O, T), 1)
    is_last = lane == (T - 1)
    # Reflect-pad tails (index T-3 of the length-(T-1) cores), applied only at lane T-1.
    l_pad = jnp.where(is_last, l_full[:, T - 3:T - 2], l_full)
    a_pad = jnp.where(is_last, a_core[:, T - 3:T - 2], a_core)

    # wide_erf m=2 sliding max with one zero appended on the right.
    a_next = jnp.concatenate([a_pad[:, 1:], jnp.zeros((O, 1), a_pad.dtype)], axis=1)
    u = jnp.maximum(a_pad, a_next)

    diff = r_pad - l_pad
    g = diff * jax.nn.sigmoid(1.702 * diff)   # QuickGELU
    # (gelu(R-L) + A + 0.5*U) + ((R+L) + A + 0.5*U); head=1, dropout p=0 is identity.
    o_ref[0] = (g + (r_pad + l_pad) + 2.0 * a_pad + u).astype(o_ref.dtype)


def tr_conv_forward(x_nct, weight, bias):
    """x_nct: (B, C, T) float32 (PyTorch NCT). weight: (O, C, 3). bias: (O,).
    Returns (B, O, T) float32, identical to TR_Conv.forward for this config.
    Channels-first throughout; B is a 'parallel' grid axis (2x on v7x, free elsewhere)."""
    B, C, T = x_nct.shape
    O = weight.shape[0]
    assert T >= 3, "reflect pad needs T >= 3"

    # Pack the 3 taps + bias into one (O, 3C+1) tile: column k*C+c holds W[:, c, k] over
    # the O sublanes; the last column is the bias.  One contiguous ~4 KiB VMEM tile.
    w_cols = jnp.transpose(weight, (0, 2, 1)).reshape(O, 3 * C)          # [o, k*C + c]
    params = jnp.concatenate([w_cols, bias[:, None]], axis=1)            # (O, 3C+1)

    return pl.pallas_call(
        tr_conv_kernel,
        out_shape=jax.ShapeDtypeStruct((B, O, T), jnp.float32),
        grid_spec=pltpu.PrefetchScalarGridSpec(
            num_scalar_prefetch=0,
            grid=(B,),                                   # batch elements are independent
            in_specs=[
                pl.BlockSpec((O, 3 * C + 1), lambda b: (0, 0)),      # resident param tile
                pl.BlockSpec((1, C, T), lambda b: (b, 0, 0)),
            ],
            out_specs=pl.BlockSpec((1, O, T), lambda b: (b, 0, 0)),
        ),
        compiler_params=pltpu.CompilerParams(dimension_semantics=("parallel",)),
    )(params, x_nct)


def tr_conv_reference(x_nct, weight, bias):
    """Pure-JAX literal transcription of the PyTorch forward for this config
    (used only to validate the kernel)."""
    B, C, T = x_nct.shape
    O = weight.shape[0]
    unit_FZ = 2
    xz = jnp.zeros((B, C, unit_FZ * (T - 1) + 1), x_nct.dtype)
    xz = xz.at[:, :, ::unit_FZ].set(x_nct)
    out = lax.conv_general_dilated(
        xz, weight, window_strides=(1,), padding=[(1, 1)],
        dimension_numbers=("NCH", "OIH", "NCH"),
        precision=lax.Precision.HIGHEST) + bias[None, :, None]

    def reflect_pad(v):
        return jnp.concatenate([v, v[:, :, -2:-1]], axis=-1)

    A = reflect_pad(out[:, :, unit_FZ - 1::unit_FZ])
    R = reflect_pad(out[:, :, unit_FZ::unit_FZ])
    L = reflect_pad(out[:, :, :-unit_FZ][:, :, ::unit_FZ])
    A_zp = jnp.concatenate([A, jnp.zeros((B, O, 1), A.dtype)], axis=-1)
    U = jnp.maximum(A_zp[:, :, :-1], A_zp[:, :, 1:])
    diff = R - L
    g = diff * jax.nn.sigmoid(1.702 * diff)
    minus_term = g + A + 0.5 * U
    add_term = (R + L) + A + 0.5 * U
    return minus_term + add_term


if __name__ == "__main__":
    B, C, T, O = 2, 4, 16, 8            # in_channels=4, out_channels=8, seq T=16
    key = jax.random.PRNGKey(0)
    kx, kw, kb = jax.random.split(key, 3)

    x = jax.random.normal(kx, (B, C, T), jnp.float32)
    # Deterministic Conv1d-style init: weight (O, C, K=3), bias (O,)
    fan_in = C * 3
    bound = 1.0 / math.sqrt(fan_in)
    weight = jax.random.uniform(kw, (O, C, 3), jnp.float32, -bound, bound)
    bias = jax.random.uniform(kb, (O,), jnp.float32, -bound, bound)

    out = tr_conv_forward(x, weight, bias)
    out = jax.block_until_ready(out)
    assert out.shape == (B, O, T)

    ref = tr_conv_reference(x, weight, bias)
    np.testing.assert_allclose(np.asarray(out), np.asarray(ref), rtol=1e-4, atol=1e-4)

    print("KERNEL_OK")
</pallas_src>

<mosaic_0001>
module attributes {stable_mosaic.version = 11 : i64} {
  func.func @tr_conv_kernel(%arg0: i32, %arg1: memref<8x13xf32, #tpu.memory_space<vmem>>, %arg2: memref<1x4x16xf32, #tpu.memory_space<vmem>>, %arg3: memref<1x8x16xf32, #tpu.memory_space<vmem>>) attributes {dimension_semantics = [#tpu.dimension_semantics<parallel>], iteration_bounds = array<i64: 2>, scalar_prefetch = 0 : i64, scratch_operands = 0 : i64, tpu.core_type = #tpu.core_type<tc>, window_params = [{pipeline_mode = #tpu.pipeline_mode<synchronous>, transform_indices = @transform_0, window_bounds = array<i64: 8, 13>}, {transform_indices = @transform_1, window_bounds = array<i64: 1, 4, 16>}, {transform_indices = @transform_2, window_bounds = array<i64: 1, 8, 16>}]} {
    %c0 = arith.constant 0 : index
    %c0_0 = arith.constant 0 : index
    %c0_1 = arith.constant 0 : index
    %0 = vector.load %arg2[%c0, %c0_0, %c0_1] : memref<1x4x16xf32, #tpu.memory_space<vmem>>, vector<1x4x16xf32>
    %1 = vector.shape_cast %0 : vector<1x4x16xf32> to vector<4x16xf32>
    %c0_2 = arith.constant 0 : index
    %c0_3 = arith.constant 0 : index
    %2 = vector.load %arg1[%c0_2, %c0_3] : memref<8x13xf32, #tpu.memory_space<vmem>>, vector<8x13xf32>
    %3 = vector.extract_strided_slice %2 {offsets = [0, 12], sizes = [8, 1], strides = [1, 1]} : vector<8x13xf32> to vector<8x1xf32>
    %4 = vector.extract_strided_slice %1 {offsets = [0, 1], sizes = [4, 15], strides = [1, 1]} : vector<4x16xf32> to vector<4x15xf32>
    %5 = vector.extract_strided_slice %1 {offsets = [0, 14], sizes = [4, 1], strides = [1, 1]} : vector<4x16xf32> to vector<4x1xf32>
    %6 = tpu.concatenate %4, %5 in 1 : vector<4x15xf32>, vector<4x1xf32> -> vector<4x16xf32>
    %7 = vector.extract_strided_slice %2 {offsets = [0, 0], sizes = [8, 1], strides = [1, 1]} : vector<8x13xf32> to vector<8x1xf32>
    %8 = vector.extract_strided_slice %1 {offsets = [0, 0], sizes = [1, 16], strides = [1, 1]} : vector<4x16xf32> to vector<1x16xf32>
    %9 = vector.broadcast %7 : vector<8x1xf32> to vector<8x16xf32>
    %10 = vector.broadcast %8 : vector<1x16xf32> to vector<8x16xf32>
    %11 = arith.mulf %9, %10 : vector<8x16xf32>
    %12 = vector.extract_strided_slice %2 {offsets = [0, 1], sizes = [8, 1], strides = [1, 1]} : vector<8x13xf32> to vector<8x1xf32>
    %13 = vector.extract_strided_slice %1 {offsets = [1, 0], sizes = [1, 16], strides = [1, 1]} : vector<4x16xf32> to vector<1x16xf32>
    %14 = vector.broadcast %12 : vector<8x1xf32> to vector<8x16xf32>
    %15 = vector.broadcast %13 : vector<1x16xf32> to vector<8x16xf32>
    %16 = arith.mulf %14, %15 : vector<8x16xf32>
    %17 = arith.addf %11, %16 : vector<8x16xf32>
    %18 = vector.extract_strided_slice %2 {offsets = [0, 2], sizes = [8, 1], strides = [1, 1]} : vector<8x13xf32> to vector<8x1xf32>
    %19 = vector.extract_strided_slice %1 {offsets = [2, 0], sizes = [1, 16], strides = [1, 1]} : vector<4x16xf32> to vector<1x16xf32>
    %20 = vector.broadcast %18 : vector<8x1xf32> to vector<8x16xf32>
    %21 = vector.broadcast %19 : vector<1x16xf32> to vector<8x16xf32>
    %22 = arith.mulf %20, %21 : vector<8x16xf32>
    %23 = arith.addf %17, %22 : vector<8x16xf32>
    %24 = vector.extract_strided_slice %2 {offsets = [0, 3], sizes = [8, 1], strides = [1, 1]} : vector<8x13xf32> to vector<8x1xf32>
    %25 = vector.extract_strided_slice %1 {offsets = [3, 0], sizes = [1, 16], strides = [1, 1]} : vector<4x16xf32> to vector<1x16xf32>
    %26 = vector.broadcast %24 : vector<8x1xf32> to vector<8x16xf32>
    %27 = vector.broadcast %25 : vector<1x16xf32> to vector<8x16xf32>
    %28 = arith.mulf %26, %27 : vector<8x16xf32>
    %29 = arith.addf %23, %28 : vector<8x16xf32>
    %30 = vector.extract_strided_slice %2 {offsets = [0, 4], sizes = [8, 1], strides = [1, 1]} : vector<8x13xf32> to vector<8x1xf32>
    %31 = vector.extract_strided_slice %1 {offsets = [0, 0], sizes = [1, 16], strides = [1, 1]} : vector<4x16xf32> to vector<1x16xf32>
    %32 = vector.broadcast %30 : vector<8x1xf32> to vector<8x16xf32>
    %33 = vector.broadcast %31 : vector<1x16xf32> to vector<8x16xf32>
    %34 = arith.mulf %32, %33 : vector<8x16xf32>
    %35 = vector.extract_strided_slice %2 {offsets = [0, 5], sizes = [8, 1], strides = [1, 1]} : vector<8x13xf32> to vector<8x1xf32>
    %36 = vector.extract_strided_slice %1 {offsets = [1, 0], sizes = [1, 16], strides = [1, 1]} : vector<4x16xf32> to vector<1x16xf32>
    %37 = vector.broadcast %35 : vector<8x1xf32> to vector<8x16xf32>
    %38 = vector.broadcast %36 : vector<1x16xf32> to vector<8x16xf32>
    %39 = arith.mulf %37, %38 : vector<8x16xf32>
    %40 = arith.addf %34, %39 : vector<8x16xf32>
    %41 = vector.extract_strided_slice %2 {offsets = [0, 6], sizes = [8, 1], strides = [1, 1]} : vector<8x13xf32> to vector<8x1xf32>
    %42 = vector.extract_strided_slice %1 {offsets = [2, 0], sizes = [1, 16], strides = [1, 1]} : vector<4x16xf32> to vector<1x16xf32>
    %43 = vector.broadcast %41 : vector<8x1xf32> to vector<8x16xf32>
    %44 = vector.broadcast %42 : vector<1x16xf32> to vector<8x16xf32>
    %45 = arith.mulf %43, %44 : vector<8x16xf32>
    %46 = arith.addf %40, %45 : vector<8x16xf32>
    %47 = vector.extract_strided_slice %2 {offsets = [0, 7], sizes = [8, 1], strides = [1, 1]} : vector<8x13xf32> to vector<8x1xf32>
    %48 = vector.extract_strided_slice %1 {offsets = [3, 0], sizes = [1, 16], strides = [1, 1]} : vector<4x16xf32> to vector<1x16xf32>
    %49 = vector.broadcast %47 : vector<8x1xf32> to vector<8x16xf32>
    %50 = vector.broadcast %48 : vector<1x16xf32> to vector<8x16xf32>
    %51 = arith.mulf %49, %50 : vector<8x16xf32>
    %52 = arith.addf %46, %51 : vector<8x16xf32>
    %53 = vector.extract_strided_slice %2 {offsets = [0, 4], sizes = [8, 1], strides = [1, 1]} : vector<8x13xf32> to vector<8x1xf32>
    %54 = vector.extract_strided_slice %6 {offsets = [0, 0], sizes = [1, 16], strides = [1, 1]} : vector<4x16xf32> to vector<1x16xf32>
    %55 = vector.broadcast %53 : vector<8x1xf32> to vector<8x16xf32>
    %56 = vector.broadcast %54 : vector<1x16xf32> to vector<8x16xf32>
    %57 = arith.mulf %55, %56 : vector<8x16xf32>
    %58 = vector.extract_strided_slice %2 {offsets = [0, 5], sizes = [8, 1], strides = [1, 1]} : vector<8x13xf32> to vector<8x1xf32>
    %59 = vector.extract_strided_slice %6 {offsets = [1, 0], sizes = [1, 16], strides = [1, 1]} : vector<4x16xf32> to vector<1x16xf32>
    %60 = vector.broadcast %58 : vector<8x1xf32> to vector<8x16xf32>
    %61 = vector.broadcast %59 : vector<1x16xf32> to vector<8x16xf32>
    %62 = arith.mulf %60, %61 : vector<8x16xf32>
    %63 = arith.addf %57, %62 : vector<8x16xf32>
    %64 = vector.extract_strided_slice %2 {offsets = [0, 6], sizes = [8, 1], strides = [1, 1]} : vector<8x13xf32> to vector<8x1xf32>
    %65 = vector.extract_strided_slice %6 {offsets = [2, 0], sizes = [1, 16], strides = [1, 1]} : vector<4x16xf32> to vector<1x16xf32>
    %66 = vector.broadcast %64 : vector<8x1xf32> to vector<8x16xf32>
    %67 = vector.broadcast %65 : vector<1x16xf32> to vector<8x16xf32>
    %68 = arith.mulf %66, %67 : vector<8x16xf32>
    %69 = arith.addf %63, %68 : vector<8x16xf32>
    %70 = vector.extract_strided_slice %2 {offsets = [0, 7], sizes = [8, 1], strides = [1, 1]} : vector<8x13xf32> to vector<8x1xf32>
    %71 = vector.extract_strided_slice %6 {offsets = [3, 0], sizes = [1, 16], strides = [1, 1]} : vector<4x16xf32> to vector<1x16xf32>
    %72 = vector.broadcast %70 : vector<8x1xf32> to vector<8x16xf32>
    %73 = vector.broadcast %71 : vector<1x16xf32> to vector<8x16xf32>
    %74 = arith.mulf %72, %73 : vector<8x16xf32>
    %75 = arith.addf %69, %74 : vector<8x16xf32>
    %76 = vector.extract_strided_slice %2 {offsets = [0, 8], sizes = [8, 1], strides = [1, 1]} : vector<8x13xf32> to vector<8x1xf32>
    %77 = vector.extract_strided_slice %6 {offsets = [0, 0], sizes = [1, 16], strides = [1, 1]} : vector<4x16xf32> to vector<1x16xf32>
    %78 = vector.broadcast %76 : vector<8x1xf32> to vector<8x16xf32>
    %79 = vector.broadcast %77 : vector<1x16xf32> to vector<8x16xf32>
    %80 = arith.mulf %78, %79 : vector<8x16xf32>
    %81 = vector.extract_strided_slice %2 {offsets = [0, 9], sizes = [8, 1], strides = [1, 1]} : vector<8x13xf32> to vector<8x1xf32>
    %82 = vector.extract_strided_slice %6 {offsets = [1, 0], sizes = [1, 16], strides = [1, 1]} : vector<4x16xf32> to vector<1x16xf32>
    %83 = vector.broadcast %81 : vector<8x1xf32> to vector<8x16xf32>
    %84 = vector.broadcast %82 : vector<1x16xf32> to vector<8x16xf32>
    %85 = arith.mulf %83, %84 : vector<8x16xf32>
    %86 = arith.addf %80, %85 : vector<8x16xf32>
    %87 = vector.extract_strided_slice %2 {offsets = [0, 10], sizes = [8, 1], strides = [1, 1]} : vector<8x13xf32> to vector<8x1xf32>
    %88 = vector.extract_strided_slice %6 {offsets = [2, 0], sizes = [1, 16], strides = [1, 1]} : vector<4x16xf32> to vector<1x16xf32>
    %89 = vector.broadcast %87 : vector<8x1xf32> to vector<8x16xf32>
    %90 = vector.broadcast %88 : vector<1x16xf32> to vector<8x16xf32>
    %91 = arith.mulf %89, %90 : vector<8x16xf32>
    %92 = arith.addf %86, %91 : vector<8x16xf32>
    %93 = vector.extract_strided_slice %2 {offsets = [0, 11], sizes = [8, 1], strides = [1, 1]} : vector<8x13xf32> to vector<8x1xf32>
    %94 = vector.extract_strided_slice %6 {offsets = [3, 0], sizes = [1, 16], strides = [1, 1]} : vector<4x16xf32> to vector<1x16xf32>
    %95 = vector.broadcast %93 : vector<8x1xf32> to vector<8x16xf32>
    %96 = vector.broadcast %94 : vector<1x16xf32> to vector<8x16xf32>
    %97 = arith.mulf %95, %96 : vector<8x16xf32>
    %98 = arith.addf %92, %97 : vector<8x16xf32>
    %99 = vector.broadcast %3 : vector<8x1xf32> to vector<8x16xf32>
    %100 = arith.addf %99, %52 : vector<8x16xf32>
    %101 = vector.broadcast %3 : vector<8x1xf32> to vector<8x16xf32>
    %102 = arith.addf %101, %75 : vector<8x16xf32>
    %103 = vector.broadcast %3 : vector<8x1xf32> to vector<8x16xf32>
    %104 = arith.addf %103, %29 : vector<8x16xf32>
    %105 = arith.addf %104, %98 : vector<8x16xf32>
    %106 = tpu.iota {dimensions = array<i32: 1>} : vector<8x16xi32>
    %c15_i32 = arith.constant 15 : i32
    %107 = vector.broadcast %c15_i32 : i32 to vector<8x16xi32>
    %108 = arith.cmpi eq, %106, %107 : vector<8x16xi32>
    %109 = vector.extract_strided_slice %100 {offsets = [0, 13], sizes = [8, 1], strides = [1, 1]} : vector<8x16xf32> to vector<8x1xf32>
    %110 = vector.shape_cast %109 : vector<8x1xf32> to vector<8x1xf32>
    %111 = vector.broadcast %110 : vector<8x1xf32> to vector<8x16xf32>
    %112 = arith.select %108, %111, %100 : vector<8x16xi1>, vector<8x16xf32>
    %113 = vector.extract_strided_slice %105 {offsets = [0, 13], sizes = [8, 1], strides = [1, 1]} : vector<8x16xf32> to vector<8x1xf32>
    %114 = vector.shape_cast %113 : vector<8x1xf32> to vector<8x1xf32>
    %115 = vector.broadcast %114 : vector<8x1xf32> to vector<8x16xf32>
    %116 = arith.select %108, %115, %105 : vector<8x16xi1>, vector<8x16xf32>
    %117 = vector.extract_strided_slice %116 {offsets = [0, 1], sizes = [8, 15], strides = [1, 1]} : vector<8x16xf32> to vector<8x15xf32>
    %cst = arith.constant 0.000000e+00 : f32
    %118 = vector.broadcast %cst : f32 to vector<8x1xf32>
    %119 = tpu.concatenate %117, %118 in 1 : vector<8x15xf32>, vector<8x1xf32> -> vector<8x16xf32>
    %120 = arith.maximumf %116, %119 : vector<8x16xf32>
    %121 = arith.subf %102, %112 : vector<8x16xf32>
    %cst_4 = arith.constant 1.702000e+00 : f32
    %122 = vector.broadcast %cst_4 : f32 to vector<8x16xf32>
    %123 = arith.mulf %122, %121 : vector<8x16xf32>
    %124 = arith.negf %123 : vector<8x16xf32>
    %125 = math.exp %124 : vector<8x16xf32>
    %cst_5 = arith.constant 1.000000e+00 : f32
    %126 = vector.broadcast %cst_5 : f32 to vector<8x16xf32>
    %127 = arith.addf %126, %125 : vector<8x16xf32>
    %128 = arith.divf %126, %127 : vector<8x16xf32>
    %129 = arith.mulf %121, %128 : vector<8x16xf32>
    %130 = arith.addf %102, %112 : vector<8x16xf32>
    %131 = arith.addf %129, %130 : vector<8x16xf32>
    %cst_6 = arith.constant 2.000000e+00 : f32
    %132 = vector.broadcast %cst_6 : f32 to vector<8x16xf32>
    %133 = arith.mulf %132, %116 : vector<8x16xf32>
    %134 = arith.addf %131, %133 : vector<8x16xf32>
    %135 = arith.addf %134, %120 : vector<8x16xf32>
    %c0_7 = arith.constant 0 : index
    %c0_8 = arith.constant 0 : index
    %c0_9 = arith.constant 0 : index
    %136 = vector.load %arg3[%c0_7, %c0_8, %c0_9] : memref<1x8x16xf32, #tpu.memory_space<vmem>>, vector<1x8x16xf32>
    %137 = vector.shape_cast %136 : vector<1x8x16xf32> to vector<8x16xf32>
    %138 = vector.shape_cast %135 : vector<8x16xf32> to vector<1x8x16xf32>
    tpu.vector_store %arg3[%c0_7, %c0_8, %c0_9], %138 {strides = array<i32>} : memref<1x8x16xf32, #tpu.memory_space<vmem>>, vector<1x8x16xf32>,
    return
  }
  func.func @transform_0(%arg0: i32) -> (i32, i32) {
    %c0_i32 = arith.constant 0 : i32
    %c0_i32_0 = arith.constant 0 : i32
    %c0_i32_1 = arith.constant 0 : i32
    return %c0_i32, %c0_i32_0 : i32, i32
  }
  func.func @transform_1(%arg0: i32) -> (i32, i32, i32) {
    %c0_i32 = arith.constant 0 : i32
    %c0_i32_0 = arith.constant 0 : i32
    %c0_i32_1 = arith.constant 0 : i32
    return %arg0, %c0_i32, %c0_i32_0 : i32, i32, i32
  }
  func.func @transform_2(%arg0: i32) -> (i32, i32, i32) {
    %c0_i32 = arith.constant 0 : i32
    %c0_i32_0 = arith.constant 0 : i32
    %c0_i32_1 = arith.constant 0 : i32
    return %arg0, %c0_i32, %c0_i32_0 : i32, i32, i32
  }
}

</mosaic_0001>

<llo_original>
// kernel: tpu_custom_call.1
$region0: #{tpu_custom_call.1}
  #allocation0 [shape = 'u32[]', space=smem, size = 0x4, offset = 0x4, fixed_abs, tag = 'smem constant byte address 0x4 - core index']
  #allocation1 [shape = 'u32[144,128]{1,0:T(1,128)}', space=vmem, size = 0x12000, scoped, tag = 'internal scratch']
  %s0 = inlined_call_operand.hbm [shape: f32[8,13], index: 0, kind: input, shape index: {}]
  %s1 = inlined_call_operand.hbm [shape: f32[2,4,16], index: 1, kind: input, shape index: {}]
  %s2 = inlined_call_operand.hbm [shape: f32[2,8,16], index: 2, kind: output, shape index: {}]
  %s3 = sld [smem:[#allocation0]]
  $region49: #{tpu_custom_call.1} parent=0
    _
  %s5 = ssub.s32 1, %s3
  %s6 = scalar_select 0, %s5, %s3
  $region1: #{tpu_custom_call.1} parent=0
    #allocation2 [shape = 'u8[4096]{0}', space=vmem, size = 0x1000, scoped, tag = 'input window, operand 0, single buffered']
    #allocation3 [shape = 's32[2]{0}', space=sflag, size = 0x8, scoped, tag = 'scoped memory for tpu_custom_call.1']
    #allocation4 [shape = 's32[2]{0}', space=sflag, size = 0x8, scoped, tag = 'scoped memory for tpu_custom_call.1']
    #allocation5 [shape = 'u8[4096]{0}', space=vmem, size = 0x1000, scoped, tag = 'input window, operand 1']
    #allocation6 [shape = 's32[2]{0}', space=sflag, size = 0x8, scoped, tag = 'scoped memory for tpu_custom_call.1']
    #allocation7 [shape = 'u8[8192]{0}', space=vmem, size = 0x2000, scoped, tag = 'output window, operand 0']
    %7 = vsyncpa [#allocation3], 0
    %8 = vsyncpa [#allocation6], 0
    %s9 = scalar_lea.sflag [#allocation6], 1
    %10 = vsyncpa %s9, 0
    %11 = vsyncpa [#allocation4], 0
    %s12 = scalar_lea.sflag [#allocation4], 1
    %13 = vsyncpa %s12, 0
    loop: start=0, step=1, limit=4
    $region2: #{tpu_custom_call.1} parent=1 // loop_pre_header
      _
    $region3: #{tpu_custom_call.1} parent=1 // loop_header
      %s15 = sphi 0, %s19
      %p16 = scmp.ge.s32.totalorder %s15, 4
      %s23 = sphi 0, %s23
      %s25 = sphi 0, %s23
      %s26 = sphi 0, %s25
      %s40 = sphi 0, %s26
      %s46 = sphi 0, %s48
      %s49 = sphi 0, %s46
      %s50 = sphi 0, %s49
      %s66 = sphi 0, %s50
      %s72 = sphi 0, %s74
      %s75 = sphi 0, %s72
      %s76 = sphi 0, %s75
      %s92 = sphi 0, %s76
    $region4: #{tpu_custom_call.1} parent=1 // loop_header_branch
      %18 = sbr.rel (%p16) target = $region8
    $region5: #{tpu_custom_call.1} parent=1 // loop_body
      %s20 = ssub.s32 %s15, 1
      %s21 = ssub.s32 %s15, 2
      %s22 = sadd.s32 %s15, 1
      %s24 = sadd.s32 %s23, 1
      %p27 = scmp.eq.s32.totalorder %s15, 1
      %p28 = scmp.ne.s32.totalorder %s23, %s25
      %p29 = scmp.eq.s32.totalorder %s15, 0
      %p30 = por %p28, %p29
      %p31 = scmp.ne.s32.totalorder %s23, %s25
      %p32 = scmp.eq.s32.totalorder %s20, 1
      %p33 = por %p31, %p32
      %p34 = scmp.ne.s32.totalorder %s25, %s26
      %p35 = scmp.eq.s32.totalorder %s20, 0
      %p36 = por %p34, %p35
      %p37 = scmp.ne.s32.totalorder %s25, %s26
      %p38 = scmp.eq.s32.totalorder %s21, 1
      %p39 = por %p37, %p38
      %p41 = scmp.ne.s32.totalorder %s26, %s40
      %p42 = scmp.eq.s32.totalorder %s21, 0
      %p43 = por %p41, %p42
      %s44 = ssub.s32 %s15, %s22
      %p45 = scmp.eq.s32.totalorder %s44, 0
      %s47 = sadd.s32 %s46, 1
      %s48 = scalar_select %p45, %s46, %s47
      %p51 = pneg %p45
      %p52 = scmp.eq.s32.totalorder %s15, 1
      %p53 = por %p51, %p52
      %p54 = scmp.ne.s32.totalorder %s46, %s49
      %p55 = scmp.eq.s32.totalorder %s15, 0
      %p56 = por %p54, %p55
      %p57 = scmp.ne.s32.totalorder %s46, %s49
      %p58 = scmp.eq.s32.totalorder %s20, 1
      %p59 = por %p57, %p58
      %p60 = scmp.ne.s32.totalorder %s49, %s50
      %p61 = scmp.eq.s32.totalorder %s20, 0
      %p62 = por %p60, %p61
      %p63 = scmp.ne.s32.totalorder %s49, %s50
      %p64 = scmp.eq.s32.totalorder %s21, 1
      %p65 = por %p63, %p64
      %p67 = scmp.ne.s32.totalorder %s50, %s66
      %p68 = scmp.eq.s32.totalorder %s21, 0
      %p69 = por %p67, %p68
      %s70 = ssub.s32 %s15, %s22
      %p71 = scmp.eq.s32.totalorder %s70, 0
      %s73 = sadd.s32 %s72, 1
      %s74 = scalar_select %p71, %s72, %s73
      %p77 = pneg %p71
      %p78 = scmp.eq.s32.totalorder %s15, 1
      %p79 = por %p77, %p78
      %p80 = scmp.ne.s32.totalorder %s72, %s75
      %p81 = scmp.eq.s32.totalorder %s15, 0
      %p82 = por %p80, %p81
      %p83 = scmp.ne.s32.totalorder %s72, %s75
      %p84 = scmp.eq.s32.totalorder %s20, 1
      %p85 = por %p83, %p84
      %p86 = scmp.ne.s32.totalorder %s75, %s76
      %p87 = scmp.eq.s32.totalorder %s20, 0
      %p88 = por %p86, %p87
      %p89 = scmp.ne.s32.totalorder %s75, %s76
      %p90 = scmp.eq.s32.totalorder %s21, 1
      %p91 = por %p89, %p90
      %p93 = scmp.ne.s32.totalorder %s76, %s92
      %p94 = scmp.eq.s32.totalorder %s21, 0
      %p95 = por %p93, %p94
      %p96 = scmp.le.s32.totalorder 1, %s15
      %p97 = scmp.lt.s32.totalorder %s15, 3
      %p98 = pnand %p96, %p97
      %p99 = pneg %p98
      // Predicated region
      $region9: #{tpu_custom_call.1} parent=5 // pred_check
        _
      $region10: #{tpu_custom_call.1} parent=5 // pred_check_branch
        %101 = sbr.rel (%p98) target = $region12
      $region11: #{tpu_custom_call.1} parent=5 // pred_region
        %s102 = ssub.s32 %s15, 1
        // Predicated region
        $region13: #{tpu_custom_call.1} parent=11 // pred_check
          %p103 = pneg %p36
        $region14: #{tpu_custom_call.1} parent=11 // pred_check_branch
          %105 = sbr.rel (%p103) target = $region16
        $region15: #{tpu_custom_call.1} parent=11 // pred_region
          %s107 = ssub.s32 128, 128
          %108 = vsyncadd [#allocation3], %s107
          %s110 = sshll.u32 [#allocation2], 4
          %s111 = int_to_ptr.vmem [resolvable:$true] %s110
          %113 = dma.hbm_to_vmem [thread:$0]  %s0, 128, %s111, [#allocation3]
        $region16: #{tpu_custom_call.1} parent=11 // pred_fallthru
          _
      $region12: #{tpu_custom_call.1} parent=5 // pred_fallthru
        _
      %p114 = scmp.lt.s32.totalorder %s15, 2
      // Predicated region
      $region17: #{tpu_custom_call.1} parent=5 // pred_check
        %p115 = pneg %p114
      $region18: #{tpu_custom_call.1} parent=5 // pred_check_branch
        %117 = sbr.rel (%p115) target = $region20
      $region19: #{tpu_custom_call.1} parent=5 // pred_region
        // Predicated region
        $region21: #{tpu_custom_call.1} parent=19 // pred_check
          %p118 = pneg %p56
        $region22: #{tpu_custom_call.1} parent=19 // pred_check_branch
          %120 = sbr.rel (%p118) target = $region24
        $region23: #{tpu_custom_call.1} parent=19 // pred_region
          %s121 = sand.u32 %s46, 1
          %s122 = scalar_lea.sflag [#allocation6], %s121
          %s123 = sand.u32 %s46, 1
          %s124 = smul.addr %s123, 4
          %s125 = scalar_lea.vmem [#allocation5], %s124
          %s127 = ssub.s32 64, 64
          %128 = vsyncadd %s122, %s127
          %s129 = smul.addr %s15, 64
          %s130 = scalar_lea.hbm %s1, %s129
          %s132 = sshll.u32 %s125, 4
          %s133 = int_to_ptr.vmem [resolvable:$true] %s132
          %135 = dma.hbm_to_vmem [thread:$0]  %s130, 64, %s133, %s122
        $region24: #{tpu_custom_call.1} parent=19 // pred_fallthru
          _
      $region20: #{tpu_custom_call.1} parent=5 // pred_fallthru
        _
      %p136 = scmp.le.s32.totalorder 1, %s15
      %p137 = scmp.lt.s32.totalorder %s15, 3
      %p138 = pnand %p136, %p137
      %p139 = pneg %p138
      // Predicated region
      $region25: #{tpu_custom_call.1} parent=5 // pred_check
        _
      $region26: #{tpu_custom_call.1} parent=5 // pred_check_branch
        %141 = sbr.rel (%p138) target = $region28
      $region27: #{tpu_custom_call.1} parent=5 // pred_region
        %s142 = ssub.s32 %s15, 1
        // Predicated region
        $region29: #{tpu_custom_call.1} parent=27 // pred_check
          %p143 = pneg %p36
        $region30: #{tpu_custom_call.1} parent=27 // pred_check_branch
          %145 = sbr.rel (%p143) target = $region32
        $region31: #{tpu_custom_call.1} parent=27 // pred_region
          %146 = dma.done [#allocation3], 128
        $region32: #{tpu_custom_call.1} parent=27 // pred_fallthru
          _
        %s147 = sand.u32 %s49, 1
        %s148 = scalar_lea.sflag [#allocation6], %s147
        %s149 = sand.u32 %s49, 1
        %s150 = smul.addr %s149, 4
        %s151 = scalar_lea.vmem [#allocation5], %s150
        // Predicated region
        $region33: #{tpu_custom_call.1} parent=27 // pred_check
          %p152 = pneg %p62
        $region34: #{tpu_custom_call.1} parent=27 // pred_check_branch
          %154 = sbr.rel (%p152) target = $region36
        $region35: #{tpu_custom_call.1} parent=27 // pred_region
          %155 = dma.done %s148, 64
        $region36: #{tpu_custom_call.1} parent=27 // pred_fallthru
          _
        %p156 = pneg %p36
        %p157 = pneg %p33
        %s158 = sand.u32 %s49, 1
        %s159 = scalar_lea.sflag [#allocation6], %s158
        %s160 = sand.u32 %s49, 1
        %s161 = smul.addr %s160, 4
        %s162 = scalar_lea.vmem [#allocation5], %s161
        %p163 = pneg %p62
        %p164 = pneg %p59
        %p165 = pneg %p88
        %p166 = pneg %p85
        %s167 = sand.u32 %s75, 1
        %s168 = scalar_lea.sflag [#allocation4], %s167
        %s169 = sand.u32 %s75, 1
        %s170 = smul.addr %s169, 8
        %s171 = scalar_lea.vmem [#allocation7], %s170
        %v172 = vld [vmem:[%s151] sm:$0xf]
        %v173 = vld [vmem:[#allocation2] sm:$0xff]
        %175 = vrot.lane.b32.xlu0 %v172, 127
        %v176 = vpop.permute.xlu0 %175
        %178 = vrot.lane.b32.xlu0 %v172, 1
        %v179 = vpop.permute.xlu0 %178
        %vm181 = vcmask 121856
        %v182 = vsel %vm181, %v176, %v179
        %184 = vset.pattern.permute.xlu0 0
        %185 = vperm.xlu0 %184, %v173
        %v186 = vpop.permute.xlu0 %185
        %v188 = vlaneseq
        %v189 = vshrl.u32 %v188, 7
        %v190 = vsub.s32 0, %v189
        %v191 = vrot.slane %v172, %v190
        %v192 = vmul.f32 %v186, %v191
        %193 = vset.pattern.permute.xlu0 1
        %194 = vperm.xlu0 %193, %v173
        %v195 = vpop.permute.xlu0 %194
        %v197 = vlaneseq
        %v198 = vshrl.u32 %v197, 7
        %v199 = vsub.s32 1, %v198
        %v200 = vrot.slane %v172, %v199
        %v201 = vmul.f32 %v195, %v200
        %v202 = vadd.f32 %v192, %v201
        %203 = vset.pattern.permute.xlu0 2
        %204 = vperm.xlu0 %203, %v173
        %v205 = vpop.permute.xlu0 %204
        %v207 = vlaneseq
        %v208 = vshrl.u32 %v207, 7
        %v209 = vsub.s32 2, %v208
        %v210 = vrot.slane %v172, %v209
        %v211 = vmul.f32 %v205, %v210
        %v212 = vadd.f32 %v202, %v211
        %213 = vset.pattern.permute.xlu0 3
        %214 = vperm.xlu0 %213, %v173
        %v215 = vpop.permute.xlu0 %214
        %v217 = vlaneseq
        %v218 = vshrl.u32 %v217, 7
        %v219 = vsub.s32 3, %v218
        %v220 = vrot.slane %v172, %v219
        %v221 = vmul.f32 %v215, %v220
        %v222 = vadd.f32 %v212, %v221
        %223 = vset.pattern.permute.xlu0 4
        %224 = vperm.xlu0 %223, %v173
        %v225 = vpop.permute.xlu0 %224
        %v227 = vmul.f32 %v225, %v191
        %228 = vset.pattern.permute.xlu0 5
        %229 = vperm.xlu0 %228, %v173
        %v230 = vpop.permute.xlu0 %229
        %v232 = vmul.f32 %v230, %v200
        %v233 = vadd.f32 %v227, %v232
        %234 = vset.pattern.permute.xlu0 6
        %235 = vperm.xlu0 %234, %v173
        %v236 = vpop.permute.xlu0 %235
        %v238 = vmul.f32 %v236, %v210
        %v239 = vadd.f32 %v233, %v238
        %240 = vset.pattern.permute.xlu0 7
        %241 = vperm.xlu0 %240, %v173
        %v242 = vpop.permute.xlu0 %241
        %v244 = vmul.f32 %v242, %v220
        %v245 = vadd.f32 %v239, %v244
        %v246 = vlaneseq
        %v247 = vshrl.u32 %v246, 7
        %v248 = vsub.s32 0, %v247
        %v249 = vrot.slane %v182, %v248
        %v250 = vmul.f32 %v225, %v249
        %v251 = vlaneseq
        %v252 = vshrl.u32 %v251, 7
        %v253 = vsub.s32 1, %v252
        %v254 = vrot.slane %v182, %v253
        %v255 = vmul.f32 %v230, %v254
        %v256 = vadd.f32 %v250, %v255
        %v257 = vlaneseq
        %v258 = vshrl.u32 %v257, 7
        %v259 = vsub.s32 2, %v258
        %v260 = vrot.slane %v182, %v259
        %v261 = vmul.f32 %v236, %v260
        %v262 = vadd.f32 %v256, %v261
        %v263 = vlaneseq
        %v264 = vshrl.u32 %v263, 7
        %v265 = vsub.s32 3, %v264
        %v266 = vrot.slane %v182, %v265
        %v267 = vmul.f32 %v242, %v266
        %v268 = vadd.f32 %v262, %v267
        %269 = vset.pattern.permute.xlu0 8
        %270 = vperm.xlu0 %269, %v173
        %v271 = vpop.permute.xlu0 %270
        %v273 = vmul.f32 %v271, %v249
        %274 = vset.pattern.permute.xlu0 9
        %275 = vperm.xlu0 %274, %v173
        %v276 = vpop.permute.xlu0 %275
        %v278 = vmul.f32 %v276, %v254
        %v279 = vadd.f32 %v273, %v278
        %280 = vset.pattern.permute.xlu0 10
        %281 = vperm.xlu0 %280, %v173
        %v282 = vpop.permute.xlu0 %281
        %v284 = vmul.f32 %v282, %v260
        %v285 = vadd.f32 %v279, %v284
        %286 = vset.pattern.permute.xlu0 11
        %287 = vperm.xlu0 %286, %v173
        %v288 = vpop.permute.xlu0 %287
        %v290 = vmul.f32 %v288, %v266
        %v291 = vadd.f32 %v285, %v290
        %292 = vset.pattern.permute.xlu0 12
        %293 = vperm.xlu0 %292, %v173
        %v294 = vpop.permute.xlu0 %293
        %v296 = vadd.f32 %v294, %v245
        %v297 = vadd.f32 %v294, %v268
        %v298 = vadd.f32 %v294, %v222
        %v299 = vadd.f32 %v298, %v291
        %v300 = vlaneseq
        %v301 = vand.u32 %v300, 127
        %vm302 = vcmp.eq.s32.totalorder %v301, 15
        %304 = vset.pattern.permute.xlu0 13
        %305 = vperm.xlu0 %304, %v296
        %v306 = vpop.permute.xlu0 %305
        %v308 = vsel %vm302, %v306, %v296
        %310 = vset.pattern.permute.xlu0 13
        %311 = vperm.xlu0 %310, %v299
        %v312 = vpop.permute.xlu0 %311
        %v314 = vsel %vm302, %v312, %v299
        %316 = vrot.lane.b32.xlu0 %v314, 127
        %v317 = vpop.permute.xlu0 %316
        %v319 = vsel %vm181, %v317, 0.0
        %v320 = vmax.f32 %v314, %v319
        %v321 = vsub.f32 %v297, %v308
        %v322 = vmul.f32 %v321, 1.702
        %v323 = vxor.u32 %v322, 2147483648
        %v324 = vmul.f32 %v323, 1.442695
        %v325 = vpow.pop %v324
        %v326 = vadd.f32 %v325, 1.0
        %v327 = vrcp.pop %v326
        %v328 = vmul.f32 1.0, %v327
        %v329 = vmul.f32 %v321, %v328
        %v330 = vadd.f32 %v297, %v308
        %v331 = vadd.f32 %v329, %v330
        %v332 = vmul.f32 %v314, 2.0
        %v333 = vadd.f32 %v331, %v332
        %v334 = vadd.f32 %v333, %v320
        %vm335 = vcmask 130048
        %336 = vst.msk [vmem:[%s171] sm:$0xff] %vm335, %v334
        %s337 = sand.u32 %s75, 1
        %s338 = scalar_lea.sflag [#allocation4], %s337
        %s339 = sand.u32 %s75, 1
        %s340 = smul.addr %s339, 8
        %s341 = scalar_lea.vmem [#allocation7], %s340
        // Predicated region
        $region37: #{tpu_custom_call.1} parent=27 // pred_check
          %p342 = pneg %p85
        $region38: #{tpu_custom_call.1} parent=27 // pred_check_branch
          %344 = sbr.rel (%p342) target = $region40
        $region39: #{tpu_custom_call.1} parent=27 // pred_region
          %s346 = ssub.s32 128, 128
          %347 = vsyncadd %s338, %s346
          %s348 = smul.addr %s20, 128
          %s349 = scalar_lea.hbm %s2, %s348
          %s351 = sshll.u32 %s341, 4
          %s352 = int_to_ptr.vmem [resolvable:$true] %s351
          %354 = dma.vmem_to_hbm [thread:$0]  %s352, 128, %s349, %s338
        $region40: #{tpu_custom_call.1} parent=27 // pred_fallthru
          _
      $region28: #{tpu_custom_call.1} parent=5 // pred_fallthru
        _
      %p355 = scmp.le.s32.totalorder 2, %s15
      // Predicated region
      $region41: #{tpu_custom_call.1} parent=5 // pred_check
        %p356 = pneg %p355
      $region42: #{tpu_custom_call.1} parent=5 // pred_check_branch
        %358 = sbr.rel (%p356) target = $region44
      $region43: #{tpu_custom_call.1} parent=5 // pred_region
        %s359 = ssub.s32 %s15, 2
        // Predicated region
        $region45: #{tpu_custom_call.1} parent=43 // pred_check
          %p360 = pneg %p91
        $region46: #{tpu_custom_call.1} parent=43 // pred_check_branch
          %362 = sbr.rel (%p360) target = $region48
        $region47: #{tpu_custom_call.1} parent=43 // pred_region
          %s363 = sand.u32 %s76, 1
          %s364 = scalar_lea.sflag [#allocation4], %s363
          %s365 = sand.u32 %s76, 1
          %s366 = smul.addr %s365, 8
          %s367 = scalar_lea.vmem [#allocation7], %s366
          %368 = dma.done %s364, 128
        $region48: #{tpu_custom_call.1} parent=43 // pred_fallthru
          _
      $region44: #{tpu_custom_call.1} parent=5 // pred_fallthru
        _
    $region6: #{tpu_custom_call.1} parent=1 // loop_footer
      %s19 = sadd.s32 1, %s15
    $region7: #{tpu_custom_call.1} parent=1 // loop_footer_branch
      %14 = sbr.rel target = $region3
    $region8: #{tpu_custom_call.1} parent=1 // loop_exit
      _
    %369 = vsyncpa [#allocation3], 1
    %s370 = scalar_lea.sflag [#allocation3], 1
    %371 = vsyncpa %s370, 1
    %372 = vsyncpa [#allocation6], 1
    %s373 = scalar_lea.sflag [#allocation6], 1
    %374 = vsyncpa %s373, 1
    %375 = vsyncpa [#allocation4], 1
    %s376 = scalar_lea.sflag [#allocation4], 1
    %377 = vsyncpa %s376, 1

</llo_original>
